<compile_context>
chip_gen: v6e
topology: v6e:2x2x1
jax: 0.10.0
libtpu: 0.0.40
codegen_flags: <defaults>
</compile_context>

<pallas_src>
import functools

import jax
import jax.numpy as jnp
from jax.experimental import pallas as pl
from jax.experimental.pallas import tpu as pltpu

_LANE = 128
_SUB = 8


def _detect_vmem_params():
    """(per-input per-buffer block byte budget, scoped vmem limit) by TPU gen."""
    try:
        info = pltpu.get_tpu_info()
        vmem_phys = int(getattr(info, "vmem_capacity_bytes", 64 * 1024 * 1024))
    except Exception:  # unknown chip / emulator -> conservative defaults
        vmem_phys = 64 * 1024 * 1024
    if vmem_phys >= 128 * 1024 * 1024:          # v5e / v6e: 128 MiB physical
        return 8 * 1024 * 1024, 64 * 1024 * 1024
    return 4 * 1024 * 1024, 40 * 1024 * 1024    # v7x: 64 MiB per TensorCore


_BLOCK_BYTES_BUDGET, _VMEM_LIMIT_BYTES = _detect_vmem_params()


def _choose_tile(n_rows_arr: int, cols: int, itemsize: int, tile_override):
    """Pick a sublane-aligned row-tile whose *VMEM* footprint fits the budget."""
    mult = _SUB * max(1, 4 // int(itemsize))     # f32 -> 8, bf16 -> 16, int8 -> 32
    # VMEM footprint of a (tile, cols) block is lane-padded to multiples of 128.
    cols_padded = ((int(cols) + _LANE - 1) // _LANE) * _LANE
    row_bytes = max(1, cols_padded * int(itemsize))
    if tile_override is not None:
        t = int(tile_override)
    else:
        t = max(mult, _BLOCK_BYTES_BUDGET // row_bytes)
    if t >= n_rows_arr:
        return n_rows_arr                        # full array = always legal
    t = max(mult, (t // mult) * mult)
    if t >= n_rows_arr:
        return n_rows_arr
    return t


def _make_elementwise_kernel(loss_type: str, n_valid_rows: int, tile: int,
                             blocks_per_core: int, grid_blocks: int,
                             scale: float):
    """Lane-dense packed kernel for mse / mse_sum / l1 (no target normalize)."""
    last_full_block = n_valid_rows // tile       # blocks with no masked rows
    ragged = grid_blocks > last_full_block       # partial or phantom blocks exist
    aligned = (tile % _SUB) == 0                 # False only for one tiny block

    def accumulate(acc_ref, elem):
        if aligned:
            # (tile,128) -> (8,128): vreg-aligned grouped sum, pure VPU adds.
            acc_ref[...] += elem.reshape(tile // _SUB, _SUB, _LANE).sum(axis=0)
        else:
            acc_ref[0:1, :] += jnp.sum(elem, axis=0, keepdims=True)

    def kernel(x_ref, t_ref, o_ref, acc_ref):
        c = pl.program_id(0)
        j = pl.program_id(1)

        @pl.when(j == 0)
        def _init():
            acc_ref[...] = jnp.zeros_like(acc_ref)

        block_idx = c * blocks_per_core + j
        x = x_ref[...].astype(jnp.float32)
        t = t_ref[...].astype(jnp.float32)
        diff = x - t
        elem = jnp.abs(diff) if loss_type == "l1" else diff * diff

        if ragged:
            @pl.when(block_idx >= last_full_block)
            def _edge():  # partial last block or phantom block: mask rows
                row_ids = block_idx * tile + jax.lax.broadcasted_iota(
                    jnp.int32, (tile, 1), 0)
                accumulate(acc_ref,
                           jnp.where(row_ids < n_valid_rows, elem, 0.0))

            @pl.when(block_idx < last_full_block)
            def _full():
                accumulate(acc_ref, elem)
        else:
            accumulate(acc_ref, elem)

        @pl.when(j == pl.num_programs(1) - 1)
        def _finalize():
            o_ref[...] = acc_ref[...] * jnp.float32(scale)

    return kernel


def _make_row_kernel(loss_type: str, normalize_target: bool, d: int,
                     n_valid_rows: int, tile: int, blocks_per_core: int,
                     grid_blocks: int, scale: float):
    """Row-structured kernel (cosine, cross_entropy_sum, or normalize_target)."""
    last_full_block = n_valid_rows // tile
    ragged = grid_blocks > last_full_block
    aligned = (tile % _SUB) == 0
    # PyTorch .var() is unbiased (N-1 denominator); d == 1 -> NaN, like torch.
    inv_dm1 = (1.0 / float(d - 1)) if d > 1 else float("nan")

    def accumulate(acc_ref, per_row):
        if aligned:
            acc_ref[...] += per_row.reshape(tile // _SUB, _SUB, 1).sum(axis=0)
        else:
            acc_ref[0:1, :] += jnp.sum(per_row, axis=0, keepdims=True)

    def kernel(x_ref, t_ref, o_ref, acc_ref):
        c = pl.program_id(0)
        j = pl.program_id(1)

        @pl.when(j == 0)
        def _init():
            acc_ref[...] = jnp.zeros_like(acc_ref)

        block_idx = c * blocks_per_core + j
        x = x_ref[...].astype(jnp.float32)
        t = t_ref[...].astype(jnp.float32)

        if normalize_target:
            mean = jnp.mean(t, axis=-1, keepdims=True)
            var = jnp.sum((t - mean) ** 2, axis=-1, keepdims=True) * inv_dm1
            t = (t - mean) * jax.lax.rsqrt(var + 1e-6)     # rsqrt -> EUP slot

        if loss_type in ("mse", "mse_sum"):
            diff = x - t
            per_row = jnp.sum(diff * diff, axis=-1, keepdims=True)
        elif loss_type == "l1":
            per_row = jnp.sum(jnp.abs(x - t), axis=-1, keepdims=True)
        elif loss_type == "cosine":
            # max(sqrt(n2), eps) == sqrt(max(n2, eps^2)) -> single rsqrt.
            eps2 = 1e-8 * 1e-8
            dot = jnp.sum(x * t, axis=-1, keepdims=True)
            nx2 = jnp.sum(x * x, axis=-1, keepdims=True)
            nt2 = jnp.sum(t * t, axis=-1, keepdims=True)
            per_row = dot * jax.lax.rsqrt(
                jnp.maximum(nx2, eps2) * jnp.maximum(nt2, eps2))
        elif loss_type == "cross_entropy_sum":
            # Soft-label cross entropy: -sum_c target_c * log_softmax(x)_c
            m = jnp.max(x, axis=-1, keepdims=True)
            lse = jnp.log(jnp.sum(jnp.exp(x - m), axis=-1, keepdims=True)) + m
            per_row = -jnp.sum(t * (x - lse), axis=-1, keepdims=True)
        else:
            raise ValueError(f"Unknown loss {loss_type}")

        if ragged:
            @pl.when(block_idx >= last_full_block)
            def _edge():
                row_ids = block_idx * tile + jax.lax.broadcasted_iota(
                    jnp.int32, (tile, 1), 0)
                accumulate(acc_ref,
                           jnp.where(row_ids < n_valid_rows, per_row, 0.0))

            @pl.when(block_idx < last_full_block)
            def _full():
                accumulate(acc_ref, per_row)
        else:
            accumulate(acc_ref, per_row)

        @pl.when(j == pl.num_programs(1) - 1)
        def _finalize():
            o_ref[...] = jnp.broadcast_to(
                acc_ref[...] * jnp.float32(scale), o_ref.shape)

    return kernel


@functools.partial(
    jax.jit,
    static_argnames=("loss_type", "weight", "normalize_target", "tile_rows"))
def reconstruction_loss(inp, target, *, loss_type: str, weight: float = 1.0,
                        normalize_target: bool = False, tile_rows=None):
    """JAX/Pallas equivalent of ocl.losses.ReconstructionLoss.forward."""
    if loss_type not in ("mse", "mse_sum", "l1", "cosine", "cross_entropy_sum"):
        raise ValueError(f"Unknown loss {loss_type}")

    target = jax.lax.stop_gradient(target)       # target.detach()
    batch_size = inp.shape[0]
    d = inp.shape[-1]
    n_rows = 1
    for s in inp.shape[:-1]:
        n_rows *= s
    total = n_rows * d
    itemsize = max(jnp.dtype(inp.dtype).itemsize,
                   jnp.dtype(target.dtype).itemsize)

    # Scalar scale (includes weight and sign), applied once at the final write.
    if loss_type in ("mse", "l1"):
        scale = float(weight) / float(total)
    elif loss_type == "mse_sum":
        scale = float(weight) / float(batch_size)
    elif loss_type == "cosine":
        scale = -float(weight) / float(n_rows)   # per_row = +cos similarity
    else:  # cross_entropy_sum
        scale = float(weight) / float(batch_size)

    # Lane-dense elementwise path only when the flat reshape is free (no pad /
    # no extra HBM copy); otherwise use the exact (n_rows, d) row layout.
    elementwise = (loss_type in ("mse", "mse_sum", "l1")
                   and not normalize_target and total % _LANE == 0)

    if elementwise:
        m_rows = total // _LANE
        cols = _LANE
    else:
        m_rows = n_rows
        cols = d
    x2 = inp.reshape(m_rows, cols)               # free reshape (no copy)
    t2 = target.reshape(m_rows, cols)

    tile = _choose_tile(m_rows, cols, itemsize, tile_rows)
    n_blocks = -(-m_rows // tile)
    # Split row-blocks across the two TensorCores on v7x (harmless elsewhere).
    # Odd block counts are handled with a zero-masked phantom block so the
    # split never silently disappears.
    if n_blocks >= 2:
        n_cores = 2
        blocks_per_core = -(-n_blocks // 2)
    else:
        n_cores, blocks_per_core = 1, n_blocks
    grid_blocks = n_cores * blocks_per_core

    if elementwise:
        kernel = _make_elementwise_kernel(loss_type, m_rows, tile,
                                          blocks_per_core, grid_blocks, scale)
        acc_shape = (_SUB, _LANE)
    else:
        kernel = _make_row_kernel(loss_type, normalize_target, d, m_rows, tile,
                                  blocks_per_core, grid_blocks, scale)
        acc_shape = (_SUB, 1)
        # TODO(synk): pack 128/d rows per vreg row for d<128 row losses (v7x
        # VPU/XLU efficiency) — requires segmented lane reductions.

    def in_map(c, j):
        # Clamp phantom blocks (odd n_blocks on 2 cores) to an in-bounds DMA;
        # their contribution is zero-masked inside the kernel.
        return (jnp.minimum(c * blocks_per_core + j, n_blocks - 1), 0)

    # Advisory cost so XLA can overlap neighbors with this HBM-bound kernel.
    flops = 4 * total if loss_type in ("cosine", "cross_entropy_sum") else 3 * total
    if loss_type == "cross_entropy_sum":
        transcendentals = total
    elif loss_type == "cosine" or normalize_target:
        transcendentals = n_rows
    else:
        transcendentals = 0
    cost = pl.CostEstimate(flops=int(flops),
                           transcendentals=int(transcendentals),
                           bytes_accessed=int(2 * total * itemsize))

    out = pl.pallas_call(
        kernel,
        out_shape=jax.ShapeDtypeStruct((_SUB * n_cores, _LANE), jnp.float32),
        grid=(n_cores, blocks_per_core),
        in_specs=[pl.BlockSpec((tile, cols), in_map),
                  pl.BlockSpec((tile, cols), in_map)],
        # Each core owns its own lane-dense (8,128) output tile -> no races.
        out_specs=pl.BlockSpec((_SUB, _LANE), lambda c, j: (c, 0)),
        scratch_shapes=[pltpu.VMEM(acc_shape, jnp.float32)],
        compiler_params=pltpu.CompilerParams(
            dimension_semantics=("parallel", "arbitrary"),
            vmem_limit_bytes=_VMEM_LIMIT_BYTES),
        cost_estimate=cost,
    )(x2, t2)

    if elementwise:
        # (8*n_cores, 128) vector partials -> scalar (1024-way partial sums).
        return jnp.sum(out)
    # Row kernel broadcasts its (8,1) partials across lanes; take lane 0.
    return jnp.sum(out[:, 0])


# ---------------- pure-JAX reference (mirrors the PyTorch semantics) ----------
def reference_loss(inp, target, *, loss_type, weight=1.0, normalize_target=False):
    inp = inp.astype(jnp.float32)
    target = target.astype(jnp.float32)
    d = target.shape[-1]
    if normalize_target:
        mean = jnp.mean(target, axis=-1, keepdims=True)
        var = jnp.sum((target - mean) ** 2, axis=-1, keepdims=True) / (d - 1)
        target = (target - mean) / jnp.sqrt(var + 1e-6)
    if loss_type == "mse":
        loss = jnp.mean((inp - target) ** 2)
    elif loss_type == "mse_sum":
        loss = jnp.sum((inp - target) ** 2) / inp.shape[0]
    elif loss_type == "l1":
        loss = jnp.mean(jnp.abs(inp - target))
    elif loss_type == "cosine":
        eps = 1e-8
        dot = jnp.sum(inp * target, axis=-1)
        nx = jnp.linalg.norm(inp, axis=-1)
        nt = jnp.linalg.norm(target, axis=-1)
        loss = -jnp.mean(dot / (jnp.maximum(nx, eps) * jnp.maximum(nt, eps)))
    elif loss_type == "cross_entropy_sum":
        x = inp.reshape(-1, inp.shape[-1])
        t = target.reshape(-1, target.shape[-1])
        logp = jax.nn.log_softmax(x, axis=-1)
        loss = -jnp.sum(t * logp) / inp.shape[0]
    return weight * loss


if __name__ == "__main__":
    key = jax.random.PRNGKey(0)
    k1, k2, k3, k4, k5, k6 = jax.random.split(key, 6)

    B, S, D = 2, 8, 32
    x = jax.random.normal(k1, (B, S, D), dtype=jnp.float32)
    y = jax.random.normal(k2, (B, S, D), dtype=jnp.float32)
    y_prob = jax.nn.softmax(
        jax.random.normal(k3, (B, S, D), dtype=jnp.float32), axis=-1)

    # Larger inputs + small tile override to exercise the multi-tile grid and
    # the two-core partial-output path.
    xl = jax.random.normal(k4, (4, 16, D), dtype=jnp.float32)
    yl = jax.random.normal(k5, (4, 16, D), dtype=jnp.float32)
    yl_prob = jax.nn.softmax(yl, axis=-1)

    # Odd block count + partial last block (elementwise path: 20 packed rows).
    x5 = jax.random.normal(k6, (5, 16, D), dtype=jnp.float32)
    y5 = jax.random.normal(k1, (5, 16, D), dtype=jnp.float32)

    # Non-multiple-of-128 element count (falls back to the row layout).
    xs = jax.random.normal(k1, (2, 5, 20), dtype=jnp.float32)
    ys = jax.random.normal(k2, (2, 5, 20), dtype=jnp.float32)

    # Ragged row count (masked partial last block + phantom block, row path).
    xr = jax.random.normal(k3, (3, 7, D), dtype=jnp.float32)
    yr = jax.nn.softmax(jax.random.normal(k4, (3, 7, D), dtype=jnp.float32),
                        axis=-1)

    xb = x.astype(jnp.bfloat16)
    yb = y.astype(jnp.bfloat16)

    cases = [
        # (name,              input, target,  loss_type,           w,   norm,  tile)
        ("mse/packed",          x,   y,       "mse",               1.0, False, None),
        ("mse/norm",            x,   y,       "mse",               0.5, True,  None),
        ("mse_sum/packed",      x,   y,       "mse_sum",           1.0, False, None),
        ("l1/norm",             x,   y,       "l1",                1.0, True,  None),
        ("cosine",              x,   y,       "cosine",            2.0, False, None),
        ("cosine/norm",         x,   y,       "cosine",            1.5, True,  None),
        ("xent",                x,   y_prob,  "cross_entropy_sum", 1.0, False, None),
        ("mse/packed/tiled",    xl,  yl,      "mse",               1.0, False, 8),
        ("mse/packed/ragged",   x5,  y5,      "mse",               1.0, False, 8),
        ("l1/packed/ragged",    x5,  y5,      "l1",                1.0, False, 8),
        ("cosine/tiled",        xl,  yl,      "cosine",            1.0, False, 8),
        ("xent/tiled",          xl,  yl_prob, "cross_entropy_sum", 1.0, False, 8),
        ("l1/lane-pad",         xs,  ys,      "l1",                1.0, False, None),
        ("xent/ragged",         xr,  yr,      "cross_entropy_sum", 1.0, False, 8),
        ("mse_sum/bf16",        xb,  yb,      "mse_sum",           1.0, False, None),
        ("mse/bf16/norm",       xb,  yb,      "mse",               1.0, True,  None),
    ]

    ok = True
    for name, a, b, lt, w, norm, tr in cases:
        got = reconstruction_loss(a, b, loss_type=lt, weight=w,
                                  normalize_target=norm, tile_rows=tr)
        got = jax.block_until_ready(got)
        want = reference_loss(a, b, loss_type=lt, weight=w,
                              normalize_target=norm)
        if not jnp.allclose(got, want, rtol=2e-5, atol=2e-5):
            ok = False
            print(f"MISMATCH {name}: got={float(got)} want={float(want)}")

    if ok:
        print("KERNEL_OK")
</pallas_src>

<mosaic_0001>
module attributes {stable_mosaic.version = 11 : i64} {
  func.func @kernel(%arg0: i32, %arg1: i32, %arg2: memref<4x128xf32, #tpu.memory_space<vmem>>, %arg3: memref<4x128xf32, #tpu.memory_space<vmem>>, %arg4: memref<8x128xf32, #tpu.memory_space<vmem>>, %arg5: memref<8x128xf32, #tpu.memory_space<vmem>>) attributes {dimension_semantics = [#tpu.dimension_semantics<parallel>, #tpu.dimension_semantics<arbitrary>], iteration_bounds = array<i64: 1, 1>, scalar_prefetch = 0 : i64, scratch_operands = 1 : i64, tpu.core_type = #tpu.core_type<tc>, window_params = [{transform_indices = @transform_0, window_bounds = array<i64: 4, 128>}, {transform_indices = @transform_1, window_bounds = array<i64: 4, 128>}, {transform_indices = @transform_2, window_bounds = array<i64: 8, 128>}]} {
    %c0_i32 = arith.constant 0 : i32
    %0 = arith.cmpi eq, %arg1, %c0_i32 : i32
    %1 = arith.extui %0 : i1 to i32
    %c0_i32_0 = arith.constant 0 : i32
    %2 = arith.cmpi ne, %1, %c0_i32_0 : i32
    scf.if %2 {
      %cst_10 = arith.constant 0.000000e+00 : f32
      %15 = vector.broadcast %cst_10 : f32 to vector<8x128xf32>
      %c0_11 = arith.constant 0 : index
      %c0_12 = arith.constant 0 : index
      %16 = vector.load %arg5[%c0_11, %c0_12] : memref<8x128xf32, #tpu.memory_space<vmem>>, vector<8x128xf32>
      tpu.vector_store %arg5[%c0_11, %c0_12], %15 {strides = array<i32>} : memref<8x128xf32, #tpu.memory_space<vmem>>, vector<8x128xf32>,
    } else {
    }
    %c0 = arith.constant 0 : index
    %c0_1 = arith.constant 0 : index
    %3 = vector.load %arg2[%c0, %c0_1] : memref<4x128xf32, #tpu.memory_space<vmem>>, vector<4x128xf32>
    %c0_2 = arith.constant 0 : index
    %c0_3 = arith.constant 0 : index
    %4 = vector.load %arg3[%c0_2, %c0_3] : memref<4x128xf32, #tpu.memory_space<vmem>>, vector<4x128xf32>
    %5 = arith.subf %3, %4 : vector<4x128xf32>
    %6 = arith.mulf %5, %5 : vector<4x128xf32>
    %c0_4 = arith.constant 0 : index
    %c0_5 = arith.constant 0 : index
    %7 = vector.load %arg5[%c0_4, %c0_5] : memref<8x128xf32, #tpu.memory_space<vmem>>, vector<1x128xf32>
    %cst = arith.constant dense<0.000000e+00> : vector<128xf32>
    %8 = vector.multi_reduction <add>, %6, %cst [0] : vector<4x128xf32> to vector<128xf32>
    %9 = vector.shape_cast %8 : vector<128xf32> to vector<1x128xf32>
    %10 = arith.addf %7, %9 : vector<1x128xf32>
    %c0_6 = arith.constant 0 : index
    %c0_7 = arith.constant 0 : index
    %11 = vector.load %arg5[%c0_6, %c0_7] : memref<8x128xf32, #tpu.memory_space<vmem>>, vector<1x128xf32>
    tpu.vector_store %arg5[%c0_6, %c0_7], %10 {strides = array<i32>} : memref<8x128xf32, #tpu.memory_space<vmem>>, vector<1x128xf32>,
    %c0_i32_8 = arith.constant 0 : i32
    %12 = arith.cmpi eq, %arg1, %c0_i32_8 : i32
    %13 = arith.extui %12 : i1 to i32
    %c0_i32_9 = arith.constant 0 : i32
    %14 = arith.cmpi ne, %13, %c0_i32_9 : i32
    scf.if %14 {
      %c0_10 = arith.constant 0 : index
      %c0_11 = arith.constant 0 : index
      %15 = vector.load %arg5[%c0_10, %c0_11] : memref<8x128xf32, #tpu.memory_space<vmem>>, vector<8x128xf32>
      %cst_12 = arith.constant 0.001953125 : f32
      %16 = vector.broadcast %cst_12 : f32 to vector<8x128xf32>
      %17 = arith.mulf %15, %16 : vector<8x128xf32>
      %c0_13 = arith.constant 0 : index
      %c0_14 = arith.constant 0 : index
      %18 = vector.load %arg4[%c0_13, %c0_14] : memref<8x128xf32, #tpu.memory_space<vmem>>, vector<8x128xf32>
      tpu.vector_store %arg4[%c0_13, %c0_14], %17 {strides = array<i32>} : memref<8x128xf32, #tpu.memory_space<vmem>>, vector<8x128xf32>,
    } else {
    }
    return
  }
  func.func @transform_0(%arg0: i32, %arg1: i32) -> (i32, i32) {
    %c1_i32 = arith.constant 1 : i32
    %0 = arith.muli %arg0, %c1_i32 : i32
    %1 = arith.addi %0, %arg1 : i32
    %c0_i32 = arith.constant 0 : i32
    %2 = arith.minsi %1, %c0_i32 : i32
    %c0_i32_0 = arith.constant 0 : i32
    %c0_i32_1 = arith.constant 0 : i32
    return %2, %c0_i32_0 : i32, i32
  }
  func.func @transform_1(%arg0: i32, %arg1: i32) -> (i32, i32) {
    %c1_i32 = arith.constant 1 : i32
    %0 = arith.muli %arg0, %c1_i32 : i32
    %1 = arith.addi %0, %arg1 : i32
    %c0_i32 = arith.constant 0 : i32
    %2 = arith.minsi %1, %c0_i32 : i32
    %c0_i32_0 = arith.constant 0 : i32
    %c0_i32_1 = arith.constant 0 : i32
    return %2, %c0_i32_0 : i32, i32
  }
  func.func @transform_2(%arg0: i32, %arg1: i32) -> (i32, i32) {
    %c0_i32 = arith.constant 0 : i32
    %c0_i32_0 = arith.constant 0 : i32
    return %arg0, %c0_i32 : i32, i32
  }
}

</mosaic_0001>

<llo_original>
// kernel: reconstruction_loss.1
$region0: #{reconstruction_loss.1}
  #allocation0 [shape = 'u32[]', space=smem, size = 0x4, offset = 0x4, fixed_abs, tag = 'smem constant byte address 0x4 - core index']
  #allocation1 [shape = 'u32[144,128]{1,0:T(1,128)}', space=vmem, size = 0x12000, scoped, tag = 'internal scratch']
  #allocation2 [shape = 'f32[8,128]{1,0:T(8,128)}', space=vmem, size = 0x1000, scoped, tag = 'scratch operand']
  %s0 = inlined_call_operand.vmem [shape: f32[4,128], index: 0, kind: input, shape index: {}]
  %s1 = inlined_call_operand.vmem [shape: f32[4,128], index: 1, kind: input, shape index: {}]
  %s2 = inlined_call_operand.vmem [shape: f32[8,128], index: 2, kind: output, shape index: {}]
  %s3 = sld [smem:[#allocation0]]
  $region26: #{reconstruction_loss.1} parent=0
    _
  %s5 = ssub.s32 1, %s3
  %s6 = scalar_select 0, %s5, %s3
  // Predicated region
  $region2: #{reconstruction_loss.1} parent=0 // pred_check
    _
  $region3: #{reconstruction_loss.1} parent=0 // pred_check_branch
    %8 = sbr.rel (0) target = $region5
  $region4: #{reconstruction_loss.1} parent=0 // pred_region
    %s9 = sadd.s32 0, 0
    %p10 = scmp.lt.s32.totalorder %s9, 0
    %s11 = scalar_select %p10, %s9, 0
    %p12 = scmp.lt.s32.totalorder %s11, 0
    %s13 = scalar_select %p12, %s11, 0
    %s14 = smul.addr %s13, 4
    %s15 = scalar_lea.vmem %s0, %s14
    %s16 = sadd.s32 0, 0
    %p17 = scmp.lt.s32.totalorder %s16, 0
    %s18 = scalar_select %p17, %s16, 0
  $region5: #{reconstruction_loss.1} parent=0 // pred_fallthru
    _
  // Predicated region
  $region6: #{reconstruction_loss.1} parent=0 // pred_check
    _
  $region7: #{reconstruction_loss.1} parent=0 // pred_check_branch
    %20 = sbr.rel (0) target = $region9
  $region8: #{reconstruction_loss.1} parent=0 // pred_region
    %s21 = sadd.s32 0, 0
    %p22 = scmp.lt.s32.totalorder %s21, 0
    %s23 = scalar_select %p22, %s21, 0
    %p24 = scmp.lt.s32.totalorder %s23, 0
    %s25 = scalar_select %p24, %s23, 0
    %s26 = smul.addr %s25, 4
    %s27 = scalar_lea.vmem %s1, %s26
    %s28 = sadd.s32 0, 0
    %p29 = scmp.lt.s32.totalorder %s28, 0
    %s30 = scalar_select %p29, %s28, 0
  $region9: #{reconstruction_loss.1} parent=0 // pred_fallthru
    _
  %s31 = sadd.s32 0, 0
  %p32 = scmp.lt.s32.totalorder %s31, 0
  %s33 = scalar_select %p32, %s31, 0
  %p34 = scmp.lt.s32.totalorder %s33, 0
  %s35 = scalar_select %p34, %s33, 0
  %s36 = smul.addr %s35, 4
  %s37 = scalar_lea.vmem %s0, %s36
  %s38 = sadd.s32 0, 0
  %p39 = scmp.lt.s32.totalorder %s38, 0
  %s40 = scalar_select %p39, %s38, 0
  %p41 = scmp.lt.s32.totalorder %s40, 0
  %s42 = scalar_select %p41, %s40, 0
  %s43 = smul.addr %s42, 4
  %s44 = scalar_lea.vmem %s1, %s43
  %s45 = sadd.s32 0, 0
  %p46 = scmp.lt.s32.totalorder %s45, 0
  %s47 = scalar_select %p46, %s45, 0
  %p48 = scmp.lt.s32.totalorder %s47, 0
  %s49 = scalar_select %p48, %s47, 0
  %s50 = smul.addr %s49, 4
  %s51 = scalar_lea.vmem %s0, %s50
  %s52 = sadd.s32 0, 0
  %p53 = scmp.lt.s32.totalorder %s52, 0
  %s54 = scalar_select %p53, %s52, 0
  %s55 = sadd.s32 0, 0
  %p56 = scmp.lt.s32.totalorder %s55, 0
  %s57 = scalar_select %p56, %s55, 0
  %p58 = scmp.lt.s32.totalorder %s57, 0
  %s59 = scalar_select %p58, %s57, 0
  %s60 = smul.addr %s59, 4
  %s61 = scalar_lea.vmem %s1, %s60
  %s62 = sadd.s32 0, 0
  %p63 = scmp.lt.s32.totalorder %s62, 0
  %s64 = scalar_select %p63, %s62, 0
  %p65 = scmp.eq.s32.totalorder 0, 0
  // Predicated region
  $region10: #{reconstruction_loss.1} parent=0 // pred_check
    %p66 = pneg %p65
  $region11: #{reconstruction_loss.1} parent=0 // pred_check_branch
    %68 = sbr.rel (%p66) target = $region13
  $region12: #{reconstruction_loss.1} parent=0 // pred_region
    %69 = vst [vmem:[#allocation2] sm:$0xff] 0.0
  $region13: #{reconstruction_loss.1} parent=0 // pred_fallthru
    _
  %v70 = vld [vmem:[%s51] sm:$0xf]
  %v71 = vld [vmem:[%s61] sm:$0xf]
  %v72 = vsub.f32 %v70, %v71
  %v73 = vmul.f32 %v72, %v72
  %v74 = vld [vmem:[#allocation2] sm:$0x1]
  %vm75 = vcmask 1043456
  %v76 = vsel %vm75, %v73, 0.0
  %v77 = vrot.slane %v76, 4
  %v78 = vadd.f32 %v76, %v77
  %v79 = vrot.slane %v78, 2
  %v80 = vadd.f32 %v78, %v79
  %v81 = vrot.slane %v80, 1
  %v82 = vadd.f32 %v80, %v81
  %v83 = vadd.f32 %v74, %v82
  %84 = vst [vmem:[#allocation2] sm:$0x1] %v83
  // Predicated region
  $region14: #{reconstruction_loss.1} parent=0 // pred_check
    %p85 = pneg %p65
  $region15: #{reconstruction_loss.1} parent=0 // pred_check_branch
    %87 = sbr.rel (%p85) target = $region17
  $region16: #{reconstruction_loss.1} parent=0 // pred_region
    %v88 = vld [vmem:[#allocation2] sm:$0xff]
    %v89 = vmul.f32 %v88, 0.001953125
    %90 = vst [vmem:[%s2] sm:$0xff] %v89
  $region17: #{reconstruction_loss.1} parent=0 // pred_fallthru
    _
  // Predicated region
  $region18: #{reconstruction_loss.1} parent=0 // pred_check
    _
  $region19: #{reconstruction_loss.1} parent=0 // pred_check_branch
    %92 = sbr.rel (0) target = $region21
  $region20: #{reconstruction_loss.1} parent=0 // pred_region
    _
  $region21: #{reconstruction_loss.1} parent=0 // pred_fallthru
    _
  // Predicated region
  $region22: #{reconstruction_loss.1} parent=0 // pred_check
    _
  $region23: #{reconstruction_loss.1} parent=0 // pred_check_branch
    %94 = sbr.rel (0) target = $region25
  $region24: #{reconstruction_loss.1} parent=0 // pred_region
    _
  $region25: #{reconstruction_loss.1} parent=0 // pred_fallthru
    _

</llo_original>
